<compile_context>
chip_gen: v5e
topology: v5e:2x2
jax: 0.10.0
libtpu: 0.0.40
codegen_flags: <defaults>
</compile_context>

<pallas_src>
import functools

import numpy as np
import jax
import jax.numpy as jnp
from jax.experimental import pallas as pl
from jax.experimental.pallas import tpu as pltpu

_LANE = 128
_VMEM_LIMIT = 32 * 1024 * 1024      # explicit scoped-VMEM budget (v7x: 64 MiB physical)


# -----------------------------------------------------------------------------
# Tiling helpers
# -----------------------------------------------------------------------------
def _cdiv(a, b):
    return -(-a // b)


def _split(total, cap, mult):
    """Split `total` rows into `grid` blocks of `blk` rows (blk % mult == 0, blk ~<= cap).

    Returns (grid, blk, padded_total).  Replaces the old divisibility-based picker:
    never requires total % blk == 0 and never falls back to one giant block."""
    grid = max(1, _cdiv(total, cap))
    blk = _cdiv(_cdiv(total, grid), mult) * mult
    return grid, blk, grid * blk


# -----------------------------------------------------------------------------
# Pallas kernels
# -----------------------------------------------------------------------------
def _to_gray(r, g, b):
    return 0.2989 * r + 0.587 * g + 0.114 * b


def gray_sum_kernel(params_ref, img_ref, sum_ref, acc_ref):
    """Pass 1 of ColorJitter contrast: global sum of grayscale(brightness(img)).

    img block (3, TR, 128) f32 (each channel a dense (8,128)-tiled slab).
    acc_ref (8, 128) f32 VMEM partial accumulator: only VPU adds per grid step;
    one cross-lane reduce + one SMEM scalar write at the last step."""
    bf = params_ref[0]
    r = jnp.clip(img_ref[0] * bf, 0.0, 1.0)
    g = jnp.clip(img_ref[1] * bf, 0.0, 1.0)
    b = jnp.clip(img_ref[2] * bf, 0.0, 1.0)
    gray = _to_gray(r, g, b)                                       # (TR, 128)
    part = gray.reshape(gray.shape[0] // 8, 8, _LANE).sum(axis=0)  # (8, 128), VPU adds only

    @pl.when(pl.program_id(0) == 0)
    def _():
        acc_ref[...] = jnp.zeros_like(acc_ref)

    acc_ref[...] += part

    @pl.when(pl.program_id(0) == pl.num_programs(0) - 1)
    def _():
        sum_ref[0] = jnp.sum(acc_ref[...])


@functools.lru_cache(maxsize=None)
def make_photometric_kernel(apply_jitter, apply_gray, apply_invert):
    """ColorJitter (B->C->S->H) + Grayscale + Invert, SPECIALIZED on host-known booleans.

    params (SMEM f32[5]): [bright_f, contrast_f, sat_f, hue_f, 1/HW]
    gsum   (SMEM f32[1]): global grayscale sum after brightness (pass 1).
    img/out blocks: (3, TR, 128) f32 in [0, 1]."""

    def kernel(params_ref, gsum_ref, img_ref, out_ref):
        r = img_ref[0]
        g = img_ref[1]
        b = img_ref[2]

        if apply_jitter:
            bf = params_ref[0]
            cf = params_ref[1]
            sf = params_ref[2]
            hf = params_ref[3]
            mean = gsum_ref[0] * params_ref[4]       # global gray mean after brightness
            # brightness
            r = jnp.clip(r * bf, 0.0, 1.0)
            g = jnp.clip(g * bf, 0.0, 1.0)
            b = jnp.clip(b * bf, 0.0, 1.0)
            # contrast (blend with the global grayscale mean from pass 1)
            r = jnp.clip(cf * r + (1.0 - cf) * mean, 0.0, 1.0)
            g = jnp.clip(cf * g + (1.0 - cf) * mean, 0.0, 1.0)
            b = jnp.clip(cf * b + (1.0 - cf) * mean, 0.0, 1.0)
            # saturation (blend with per-pixel grayscale)
            gp = _to_gray(r, g, b)
            r = jnp.clip(sf * r + (1.0 - sf) * gp, 0.0, 1.0)
            g = jnp.clip(sf * g + (1.0 - sf) * gp, 0.0, 1.0)
            b = jnp.clip(sf * b + (1.0 - sf) * gp, 0.0, 1.0)
            # hue: rgb -> hsv -> h += hf -> rgb (reciprocals on the EUP)
            maxc = jnp.maximum(jnp.maximum(r, g), b)
            minc = jnp.minimum(jnp.minimum(r, g), b)
            v = maxc
            cr = maxc - minc
            inv_max = pl.reciprocal(jnp.where(maxc == 0.0, 1.0, maxc), approx=True)
            s = cr * inv_max
            inv_cr = pl.reciprocal(jnp.where(cr == 0.0, 1.0, cr), approx=True)
            rc = (maxc - r) * inv_cr
            gc = (maxc - g) * inv_cr
            bc = (maxc - b) * inv_cr
            hr = jnp.where(maxc == r, bc - gc, 0.0)
            hg = jnp.where((maxc == g) & (maxc != r), 2.0 + rc - bc, 0.0)
            hb = jnp.where((maxc != g) & (maxc != r), 4.0 + gc - rc, 0.0)
            h = (hr + hg + hb) * (1.0 / 6.0) + 1.0
            h = h - jnp.floor(h)
            h = h + hf
            h = h - jnp.floor(h)
            h6 = h * 6.0
            i = jnp.floor(h6)
            f = h6 - i
            i = jnp.where(i >= 6.0, 0.0, i)
            pp = v * (1.0 - s)
            qq = v * (1.0 - s * f)
            tt = v * (1.0 - s * (1.0 - f))
            r = jnp.where(i == 0, v, jnp.where(i == 1, qq, jnp.where(i == 2, pp,
                jnp.where(i == 3, pp, jnp.where(i == 4, tt, v)))))
            g = jnp.where(i == 0, tt, jnp.where(i == 1, v, jnp.where(i == 2, v,
                jnp.where(i == 3, qq, jnp.where(i == 4, pp, pp)))))
            b = jnp.where(i == 0, pp, jnp.where(i == 1, pp, jnp.where(i == 2, tt,
                jnp.where(i == 3, v, jnp.where(i == 4, v, qq)))))

        if apply_gray:                               # RandomApply(Grayscale(3), p=0.05)
            gray = _to_gray(r, g, b)
            r, g, b = gray, gray, gray

        if apply_invert:                             # RandomInvert(p=0.025), float bound = 1.0
            r, g, b = 1.0 - r, 1.0 - g, 1.0 - b

        # three dense (8,128)-tiled stores (no sublane-sparse concat store)
        out_ref[0] = r
        out_ref[1] = g
        out_ref[2] = b

    return kernel


@functools.lru_cache(maxsize=None)
def make_warp_kernel(n_channels):
    """Separable bilinear warp:  out[p, c] = sum_x B[p, x] * (A @ S_c)[p, x].

    A (tp, H) / B (tp, W) are the row/column bilinear factors of the composed inverse
    sampling map (exactly the 4-tap weights, which factor per axis).  The (C, H, W) bf16
    source stays VMEM-resident (constant index_map); the MXU LHS has tp (>=128) rows."""

    def kernel(src_ref, a_ref, b_ref, out_ref):
        a = a_ref[...]                                 # (tp, H) bf16
        bw = b_ref[...].astype(jnp.float32)            # (tp, W)
        cols = []
        for c in range(n_channels):                    # static, small channel count
            t = jnp.dot(a, src_ref[c], preferred_element_type=jnp.float32)  # (tp, W) f32
            cols.append(jnp.sum(t * bw, axis=1, keepdims=True))             # (tp, 1)
        out_ref[...] = jnp.concatenate(cols, axis=1)   # (tp, C)

    return kernel


# -----------------------------------------------------------------------------
# pallas_call wrappers
# -----------------------------------------------------------------------------
def gray_sum_call(params, x3, tr):
    c, rows, _ = x3.shape
    grid = rows // tr
    return pl.pallas_call(
        gray_sum_kernel,
        out_shape=jax.ShapeDtypeStruct((1,), jnp.float32),
        grid_spec=pltpu.PrefetchScalarGridSpec(
            num_scalar_prefetch=0,
            grid=(grid,),
            in_specs=[pl.BlockSpec(memory_space=pltpu.MemorySpace.SMEM),
                      pl.BlockSpec((c, tr, _LANE), lambda i: (0, i, 0))],
            out_specs=pl.BlockSpec(memory_space=pltpu.MemorySpace.SMEM),
            scratch_shapes=[pltpu.VMEM((8, _LANE), jnp.float32)]),
        compiler_params=pltpu.CompilerParams(
            dimension_semantics=("arbitrary",),
            vmem_limit_bytes=_VMEM_LIMIT),
    )(params, x3)


def photometric_call(params, gray_sum, x3, tr, flags):
    c, rows, _ = x3.shape
    grid = rows // tr
    return pl.pallas_call(
        make_photometric_kernel(*flags),
        out_shape=jax.ShapeDtypeStruct(x3.shape, jnp.float32),
        grid_spec=pltpu.PrefetchScalarGridSpec(
            num_scalar_prefetch=0,
            grid=(grid,),
            in_specs=[pl.BlockSpec(memory_space=pltpu.MemorySpace.SMEM),
                      pl.BlockSpec(memory_space=pltpu.MemorySpace.SMEM),
                      pl.BlockSpec((c, tr, _LANE), lambda i: (0, i, 0))],
            out_specs=pl.BlockSpec((c, tr, _LANE), lambda i: (0, i, 0))),
        compiler_params=pltpu.CompilerParams(
            dimension_semantics=("parallel",),
            vmem_limit_bytes=_VMEM_LIMIT),
    )(params, gray_sum, x3)


def warp_call(src_bf16, a_bf16, b_bf16, tp):
    c, h, w = src_bf16.shape
    p_pad = a_bf16.shape[0]
    grid = p_pad // tp
    return pl.pallas_call(
        make_warp_kernel(c),
        out_shape=jax.ShapeDtypeStruct((p_pad, c), jnp.float32),
        grid_spec=pltpu.PrefetchScalarGridSpec(
            num_scalar_prefetch=0,
            grid=(grid,),
            in_specs=[pl.BlockSpec((c, h, w), lambda i: (0, 0, 0)),   # VMEM-resident source
                      pl.BlockSpec((tp, h), lambda i: (i, 0)),
                      pl.BlockSpec((tp, w), lambda i: (i, 0))],
            out_specs=pl.BlockSpec((tp, c), lambda i: (i, 0))),
        compiler_params=pltpu.CompilerParams(
            dimension_semantics=("parallel",),
            vmem_limit_bytes=_VMEM_LIMIT),
    )(src_bf16, a_bf16, b_bf16)


# -----------------------------------------------------------------------------
# Host-side glue: composed inverse sampling map -> separable bilinear factors
# -----------------------------------------------------------------------------
def _base_grid(h, w):
    ys, xs = np.meshgrid(np.arange(h, dtype=np.float64),
                         np.arange(w, dtype=np.float64), indexing="ij")
    return xs.reshape(-1), ys.reshape(-1)


def build_separable_bilinear(sx, sy, h, w):
    """Row/column bilinear factors A (HW,H), B (HW,W) of the inverse map (fill=0 outside).

    For every output pixel p the 4 bilinear taps' weight and validity factor per axis, so
    sum_y A[p,y] * sum_x B[p,x] * S[y,x] is exactly the 4-tap bilinear resample."""
    hw = h * w
    x0 = np.floor(sx)
    y0 = np.floor(sy)
    fx = (sx - x0).astype(np.float32)
    fy = (sy - y0).astype(np.float32)
    x0 = x0.astype(np.int64)
    y0 = y0.astype(np.int64)
    a = np.zeros((hw, h), dtype=np.float32)
    b = np.zeros((hw, w), dtype=np.float32)
    rows = np.arange(hw)
    for dy, wy in ((0, 1.0 - fy), (1, fy)):
        yi = y0 + dy
        valid = (yi >= 0) & (yi < h)
        a[rows[valid], yi[valid]] = wy[valid]
    for dx, wx in ((0, 1.0 - fx), (1, fx)):
        xi = x0 + dx
        valid = (xi >= 0) & (xi < w)
        b[rows[valid], xi[valid]] = wx[valid]
    return a, b


def _rotation_map(x, y, angle_deg, h, w):
    th = np.deg2rad(angle_deg)
    cx, cy = (w - 1) / 2.0, (h - 1) / 2.0
    c, s = np.cos(th), np.sin(th)
    return (c * (x - cx) + s * (y - cy) + cx,
            -s * (x - cx) + c * (y - cy) + cy)


def _hflip_map(x, y, h, w):
    return (w - 1) - x, y


def _perspective_map(x, y, rng, h, w, distortion):
    half_h, half_w = h // 2, w // 2
    bw = int(distortion * half_w) + 1
    bh = int(distortion * half_h) + 1
    ri = lambda hi: int(rng.integers(0, hi))
    topleft = (ri(bw), ri(bh))
    topright = (w - 1 - ri(bw), ri(bh))
    botright = (w - 1 - ri(bw), h - 1 - ri(bh))
    botleft = (ri(bw), h - 1 - ri(bh))
    startpoints = [(0, 0), (w - 1, 0), (w - 1, h - 1), (0, h - 1)]
    endpoints = [topleft, topright, botright, botleft]
    # inverse sampling homography: output (endpoint) coords -> source (startpoint) coords
    a_rows, b_vec = [], []
    for (xe, ye), (xs_, ys_) in zip(endpoints, startpoints):
        a_rows.append([xe, ye, 1, 0, 0, 0, -xe * xs_, -ye * xs_]); b_vec.append(xs_)
        a_rows.append([0, 0, 0, xe, ye, 1, -xe * ys_, -ye * ys_]); b_vec.append(ys_)
    co = np.linalg.solve(np.array(a_rows, dtype=np.float64),
                         np.array(b_vec, dtype=np.float64))
    den = co[6] * x + co[7] * y + 1.0
    return ((co[0] * x + co[1] * y + co[2]) / den,
            (co[3] * x + co[4] * y + co[5]) / den)


def _gaussian_blur_2d(a, sigma):
    radius = int(3.0 * sigma)
    t = np.arange(-radius, radius + 1, dtype=np.float64)
    k = np.exp(-(t ** 2) / (2.0 * sigma * sigma))
    k /= k.sum()

    def blur_axis(arr, axis):
        pad = [(0, 0)] * arr.ndim
        pad[axis] = (radius, radius)
        arr_p = np.pad(arr, pad, mode="reflect")
        return np.apply_along_axis(lambda v: np.convolve(v, k, mode="valid"), axis, arr_p)

    return blur_axis(blur_axis(a, 0), 1)


def _elastic_map(x, y, rng, h, w, alpha, sigma):
    nx = rng.uniform(-1.0, 1.0, size=(h, w))
    ny = rng.uniform(-1.0, 1.0, size=(h, w))
    bx = _gaussian_blur_2d(nx, sigma)
    by = _gaussian_blur_2d(ny, sigma)
    dx = bx * alpha / h * (w / 2.0)
    dy = by * alpha / w * (h / 2.0)
    return x + dx.reshape(-1), y + dy.reshape(-1)


# -----------------------------------------------------------------------------
# OurAugment.forward equivalent
# -----------------------------------------------------------------------------
def our_augment(img, mask, seed=0, force_all=False):
    img = jnp.asarray(img, jnp.float32)
    mask = jnp.asarray(mask, jnp.float32)
    c_img, h, w = img.shape
    c_mask = mask.shape[0]
    hw = h * w

    rng = np.random.default_rng(seed)            # host RNG: no device round trips

    # ---- photometric (self.augment) ----
    apply_jitter = bool(rng.random() < 2.0 / 3.0) or force_all
    bf = float(rng.uniform(0.7, 1.3))            # brightness in [1-0.3, 1+0.3]
    cf = float(rng.uniform(0.7, 1.3))            # contrast
    sf = float(rng.uniform(0.7, 1.3))            # saturation
    hf = float(rng.uniform(-0.2, 0.2))           # hue
    apply_gray = bool(rng.random() < 0.05) or force_all
    apply_invert = bool(rng.random() < 0.025) or force_all

    img_flat = img.reshape(c_img, hw)

    if apply_jitter or apply_gray or apply_invert:
        rows = _cdiv(hw, _LANE)
        grid_r, tr, rows_pad = _split(rows, 256, 8)        # ~32K pixels (~400 KB) per block
        del grid_r
        hw_pad = rows_pad * _LANE
        x3 = jnp.pad(img_flat, ((0, 0), (0, hw_pad - hw))).reshape(c_img, rows_pad, _LANE)
        params = jnp.array([bf, cf, sf, hf, 1.0 / hw], dtype=jnp.float32)
        if apply_jitter:                                   # global gray mean only for contrast
            gray_sum = gray_sum_call(params, x3, tr)
        else:
            gray_sum = jnp.zeros((1,), jnp.float32)
        y3 = photometric_call(params, gray_sum, x3, tr,
                              (apply_jitter, apply_gray, apply_invert))
        img_aug = y3.reshape(c_img, hw_pad)[:, :hw]
    else:
        img_aug = img_flat

    # ---- spatial (self.augment_spatial) on concat([img, mask]) ----
    apply_rot = bool(rng.random() < 1.0 / 3.0) or force_all
    angle = float(rng.uniform(-15.0, 15.0))
    apply_persp = bool(rng.random() < 1.0 / 3.0) or force_all
    apply_flip = bool(rng.random() < 0.5) or force_all
    apply_elastic = bool(rng.random() < 1.0 / 3.0) or force_all

    if apply_rot or apply_persp or apply_flip or apply_elastic:
        # Compose inverse sampling maps: final-output pixel -> original source coordinate.
        # Stages applied rot -> persp -> flip -> elastic, so the composed map is
        # rot_map( persp_map( flip_map( elastic_map(p) ) ) ).
        x, y = _base_grid(h, w)
        if apply_elastic:
            x, y = _elastic_map(x, y, rng, h, w, alpha=75.0, sigma=5.0)
        if apply_flip:
            x, y = _hflip_map(x, y, h, w)
        if apply_persp:
            x, y = _perspective_map(x, y, rng, h, w, distortion=0.4)
        if apply_rot:
            x, y = _rotation_map(x, y, angle, h, w)

        a_np, b_np = build_separable_bilinear(x, y, h, w)  # O(HW*(H+W)), not O(HW^2)

        grid_p, tp, p_pad = _split(hw, 512, 16)
        del grid_p
        a_np = np.pad(a_np, ((0, p_pad - hw), (0, 0)))
        b_np = np.pad(b_np, ((0, p_pad - hw), (0, 0)))
        a_bf = jnp.asarray(a_np, dtype=jnp.bfloat16)
        b_bf = jnp.asarray(b_np, dtype=jnp.bfloat16)

        # pre-cast the warp source once to bf16; it stays VMEM-resident in the kernel
        src = jnp.concatenate([img_aug, mask.reshape(c_mask, hw)], axis=0)
        src = src.reshape(c_img + c_mask, h, w).astype(jnp.bfloat16)

        out = warp_call(src, a_bf, b_bf, tp)               # (p_pad, C) f32
        warped = out[:hw, :].T                             # tiny (C*HW*4B) layout plumbing
        img_out = warped[:c_img].reshape(c_img, h, w)
        mask_out = warped[c_img:].reshape(c_mask, h, w)
    else:
        img_out = img_aug.reshape(c_img, h, w)
        mask_out = mask

    return img_out, mask_out


if __name__ == "__main__":
    key = jax.random.PRNGKey(0)
    k_img, k_mask = jax.random.split(key)
    H, W = 16, 16
    img = jax.random.uniform(k_img, (3, H, W), dtype=jnp.float32)              # CHW image in [0,1]
    mask = (jax.random.uniform(k_mask, (1, H, W)) > 0.5).astype(jnp.float32)   # CHW mask

    # normal randomized path
    img_out, mask_out = our_augment(img, mask, seed=0)
    # force-all path: guarantees gray-sum + photometric + warp Pallas kernels all execute
    img_f, mask_f = our_augment(img, mask, seed=1, force_all=True)
    jax.block_until_ready((img_out, mask_out, img_f, mask_f))

    assert img_out.shape == (3, H, W) and mask_out.shape == (1, H, W)
    assert img_f.shape == (3, H, W) and mask_f.shape == (1, H, W)
    for t in (img_out, mask_out, img_f, mask_f):
        assert bool(jnp.all(jnp.isfinite(t)))
    print("KERNEL_OK")
</pallas_src>

<mosaic_0001>
module attributes {stable_mosaic.version = 11 : i64} {
  func.func @gray_sum_kernel(%arg0: i32, %arg1: memref<5xf32, #tpu.memory_space<smem>>, %arg2: memref<3x8x128xf32, #tpu.memory_space<vmem>>, %arg3: memref<1xf32, #tpu.memory_space<smem>>, %arg4: memref<8x128xf32, #tpu.memory_space<vmem>>) attributes {dimension_semantics = [#tpu.dimension_semantics<arbitrary>], iteration_bounds = array<i64: 1>, scalar_prefetch = 0 : i64, scratch_operands = 1 : i64, tpu.core_type = #tpu.core_type<tc>, window_params = [{transform_indices = @transform_0, window_bounds = array<i64: 5>}, {transform_indices = @transform_1, window_bounds = array<i64: 3, 8, 128>}, {transform_indices = @transform_2, window_bounds = array<i64: 1>}]} {
    %c0 = arith.constant 0 : index
    %0 = memref.load %arg1[%c0] : memref<5xf32, #tpu.memory_space<smem>>
    %c0_0 = arith.constant 0 : index
    %c0_1 = arith.constant 0 : index
    %c0_2 = arith.constant 0 : index
    %1 = vector.load %arg2[%c0_0, %c0_1, %c0_2] : memref<3x8x128xf32, #tpu.memory_space<vmem>>, vector<1x8x128xf32>
    %2 = vector.shape_cast %1 : vector<1x8x128xf32> to vector<8x128xf32>
    %3 = vector.broadcast %0 : f32 to vector<8x128xf32>
    %4 = arith.mulf %2, %3 : vector<8x128xf32>
    %cst = arith.constant 0.000000e+00 : f32
    %cst_3 = arith.constant 1.000000e+00 : f32
    %5 = vector.broadcast %cst : f32 to vector<8x128xf32>
    %6 = arith.maximumf %5, %4 : vector<8x128xf32>
    %7 = vector.broadcast %cst_3 : f32 to vector<8x128xf32>
    %8 = arith.minimumf %7, %6 : vector<8x128xf32>
    %c1 = arith.constant 1 : index
    %c0_4 = arith.constant 0 : index
    %c0_5 = arith.constant 0 : index
    %9 = vector.load %arg2[%c1, %c0_4, %c0_5] : memref<3x8x128xf32, #tpu.memory_space<vmem>>, vector<1x8x128xf32>
    %10 = vector.shape_cast %9 : vector<1x8x128xf32> to vector<8x128xf32>
    %11 = vector.broadcast %0 : f32 to vector<8x128xf32>
    %12 = arith.mulf %10, %11 : vector<8x128xf32>
    %cst_6 = arith.constant 0.000000e+00 : f32
    %cst_7 = arith.constant 1.000000e+00 : f32
    %13 = vector.broadcast %cst_6 : f32 to vector<8x128xf32>
    %14 = arith.maximumf %13, %12 : vector<8x128xf32>
    %15 = vector.broadcast %cst_7 : f32 to vector<8x128xf32>
    %16 = arith.minimumf %15, %14 : vector<8x128xf32>
    %c2 = arith.constant 2 : index
    %c0_8 = arith.constant 0 : index
    %c0_9 = arith.constant 0 : index
    %17 = vector.load %arg2[%c2, %c0_8, %c0_9] : memref<3x8x128xf32, #tpu.memory_space<vmem>>, vector<1x8x128xf32>
    %18 = vector.shape_cast %17 : vector<1x8x128xf32> to vector<8x128xf32>
    %19 = vector.broadcast %0 : f32 to vector<8x128xf32>
    %20 = arith.mulf %18, %19 : vector<8x128xf32>
    %cst_10 = arith.constant 0.000000e+00 : f32
    %cst_11 = arith.constant 1.000000e+00 : f32
    %21 = vector.broadcast %cst_10 : f32 to vector<8x128xf32>
    %22 = arith.maximumf %21, %20 : vector<8x128xf32>
    %23 = vector.broadcast %cst_11 : f32 to vector<8x128xf32>
    %24 = arith.minimumf %23, %22 : vector<8x128xf32>
    %cst_12 = arith.constant 2.989000e-01 : f32
    %25 = vector.broadcast %cst_12 : f32 to vector<8x128xf32>
    %26 = arith.mulf %25, %8 : vector<8x128xf32>
    %cst_13 = arith.constant 5.870000e-01 : f32
    %27 = vector.broadcast %cst_13 : f32 to vector<8x128xf32>
    %28 = arith.mulf %27, %16 : vector<8x128xf32>
    %29 = arith.addf %26, %28 : vector<8x128xf32>
    %cst_14 = arith.constant 1.140000e-01 : f32
    %30 = vector.broadcast %cst_14 : f32 to vector<8x128xf32>
    %31 = arith.mulf %30, %24 : vector<8x128xf32>
    %32 = arith.addf %29, %31 : vector<8x128xf32>
    %33 = vector.shape_cast %32 : vector<8x128xf32> to vector<1x8x128xf32>
    %cst_15 = arith.constant dense<0.000000e+00> : vector<8x128xf32>
    %34 = vector.multi_reduction <add>, %33, %cst_15 [0] : vector<1x8x128xf32> to vector<8x128xf32>
    %c0_i32 = arith.constant 0 : i32
    %35 = arith.cmpi eq, %arg0, %c0_i32 : i32
    %36 = arith.extui %35 : i1 to i32
    %c0_i32_16 = arith.constant 0 : i32
    %37 = arith.cmpi ne, %36, %c0_i32_16 : i32
    scf.if %37 {
      %cst_23 = arith.constant 0.000000e+00 : f32
      %44 = vector.broadcast %cst_23 : f32 to vector<8x128xf32>
      %c0_24 = arith.constant 0 : index
      %c0_25 = arith.constant 0 : index
      %45 = vector.load %arg4[%c0_24, %c0_25] : memref<8x128xf32, #tpu.memory_space<vmem>>, vector<8x128xf32>
      tpu.vector_store %arg4[%c0_24, %c0_25], %44 {strides = array<i32>} : memref<8x128xf32, #tpu.memory_space<vmem>>, vector<8x128xf32>,
    } else {
    }
    %c0_17 = arith.constant 0 : index
    %c0_18 = arith.constant 0 : index
    %38 = vector.load %arg4[%c0_17, %c0_18] : memref<8x128xf32, #tpu.memory_space<vmem>>, vector<8x128xf32>
    %39 = arith.addf %38, %34 : vector<8x128xf32>
    %c0_19 = arith.constant 0 : index
    %c0_20 = arith.constant 0 : index
    %40 = vector.load %arg4[%c0_19, %c0_20] : memref<8x128xf32, #tpu.memory_space<vmem>>, vector<8x128xf32>
    tpu.vector_store %arg4[%c0_19, %c0_20], %39 {strides = array<i32>} : memref<8x128xf32, #tpu.memory_space<vmem>>, vector<8x128xf32>,
    %c0_i32_21 = arith.constant 0 : i32
    %41 = arith.cmpi eq, %arg0, %c0_i32_21 : i32
    %42 = arith.extui %41 : i1 to i32
    %c0_i32_22 = arith.constant 0 : i32
    %43 = arith.cmpi ne, %42, %c0_i32_22 : i32
    scf.if %43 {
      %c0_23 = arith.constant 0 : index
      %c0_24 = arith.constant 0 : index
      %44 = vector.load %arg4[%c0_23, %c0_24] : memref<8x128xf32, #tpu.memory_space<vmem>>, vector<8x128xf32>
      %45 = vector.shape_cast %44 : vector<8x128xf32> to vector<1x8x128xf32>
      %cst_25 = arith.constant dense<0.000000e+00> : vector<1xf32>
      %46 = vector.multi_reduction <add>, %45, %cst_25 [1, 2] : vector<1x8x128xf32> to vector<1xf32>
      %47 = vector.shape_cast %46 : vector<1xf32> to vector<1x1x1xf32>
      %48 = vector.extract %47[0, 0, 0] : f32 from vector<1x1x1xf32>
      %c0_26 = arith.constant 0 : index
      %49 = memref.load %arg3[%c0_26] : memref<1xf32, #tpu.memory_space<smem>>
      memref.store %48, %arg3[%c0_26] : memref<1xf32, #tpu.memory_space<smem>>
    } else {
    }
    return
  }
  func.func @transform_0(%arg0: i32) -> i32 {
    %c0_i32 = arith.constant 0 : i32
    %c0_i32_0 = arith.constant 0 : i32
    return %c0_i32 : i32
  }
  func.func @transform_1(%arg0: i32) -> (i32, i32, i32) {
    %c0_i32 = arith.constant 0 : i32
    %c0_i32_0 = arith.constant 0 : i32
    %c0_i32_1 = arith.constant 0 : i32
    return %c0_i32, %arg0, %c0_i32_0 : i32, i32, i32
  }
  func.func @transform_2(%arg0: i32) -> i32 {
    %c0_i32 = arith.constant 0 : i32
    %c0_i32_0 = arith.constant 0 : i32
    return %c0_i32 : i32
  }
}

</mosaic_0001>

<llo_original>
// kernel: tpu_custom_call.1
$region0: #{tpu_custom_call.1}
  #allocation0 [shape = 'u32[]', space=smem, size = 0x4, offset = 0x4, fixed_abs, tag = 'smem constant byte address 0x4 - core index']
  #allocation1 [shape = 'u32[72,128]{1,0:T(1,128)}', space=vmem, size = 0x9000, scoped, tag = 'internal scratch']
  #allocation2 [shape = 'f32[8,128]{1,0:T(8,128)}', space=vmem, size = 0x1000, scoped, tag = 'scratch operand']
  %s0 = inlined_call_operand.hbm [shape: f32[5], index: 0, kind: input, shape index: {}]
  %s1 = inlined_call_operand.hbm [shape: f32[3,8,128], index: 1, kind: input, shape index: {}]
  %s2 = inlined_call_operand.hbm [shape: f32[1], index: 2, kind: output, shape index: {}]
  %s3 = sld [smem:[#allocation0]]
  $region34: #{tpu_custom_call.1} parent=0
    _
  %s5 = ssub.s32 1, %s3
  %s6 = scalar_select 0, %s5, %s3
  $region1: #{tpu_custom_call.1} parent=0
    #allocation3 [shape = 'u8[512]{0}', space=smem, size = 0x200, scoped, tag = 'input window, operand 0, single buffered']
    #allocation4 [shape = 's32[1]{0}', space=sflag, size = 0x4, scoped, tag = 'scoped memory for tpu_custom_call.1']
    #allocation5 [shape = 's32[1]{0}', space=sflag, size = 0x4, scoped, tag = 'scoped memory for tpu_custom_call.1']
    #allocation6 [shape = 's32[1]{0}', space=sflag, size = 0x4, scoped, tag = 'scoped memory for tpu_custom_call.1']
    #allocation7 [shape = 'u8[12288]{0}', space=vmem, size = 0x3000, scoped, tag = 'input window, operand 1, single buffered']
    #allocation8 [shape = 'u8[512]{0}', space=smem, size = 0x200, scoped, tag = 'output window, operand 0, single buffered']
    %7 = vsyncpa [#allocation5], 0
    %8 = vsyncpa [#allocation4], 0
    %9 = vsyncpa [#allocation6], 0
    // Predicated region
    $region2: #{tpu_custom_call.1} parent=1 // pred_check
      _
    $region3: #{tpu_custom_call.1} parent=1 // pred_check_branch
      %11 = sbr.rel (0) target = $region5
    $region4: #{tpu_custom_call.1} parent=1 // pred_region
      %13 = vsyncadd [#allocation5], 0
      %s15 = sshll.u32 %s0, 4
      %s16 = int_to_ptr.hbm [resolvable:$true] %s15
      %18 = dma.hbm_to_smem %s16, 16, [#allocation3], [#allocation5]
    $region5: #{tpu_custom_call.1} parent=1 // pred_fallthru
      _
    // Predicated region
    $region6: #{tpu_custom_call.1} parent=1 // pred_check
      _
    $region7: #{tpu_custom_call.1} parent=1 // pred_check_branch
      %20 = sbr.rel (0) target = $region9
    $region8: #{tpu_custom_call.1} parent=1 // pred_region
      %22 = vsyncadd [#allocation4], 0
      %s23 = sshll.u32 %s1, 4
      %s24 = int_to_ptr.hbm [resolvable:$true] %s23
      %s25 = sshll.u32 [#allocation7], 4
      %s26 = int_to_ptr.vmem [resolvable:$true] %s25
      %31 = dma.hbm_to_vmem [thread:$0]  %s24, 384, %s26, [#allocation4], 128, 128, 8
    $region9: #{tpu_custom_call.1} parent=1 // pred_fallthru
      _
    // Predicated region
    $region10: #{tpu_custom_call.1} parent=1 // pred_check
      _
    $region11: #{tpu_custom_call.1} parent=1 // pred_check_branch
      %33 = sbr.rel (0) target = $region13
    $region12: #{tpu_custom_call.1} parent=1 // pred_region
      %35 = dma.done [#allocation5], 16
    $region13: #{tpu_custom_call.1} parent=1 // pred_fallthru
      _
    // Predicated region
    $region14: #{tpu_custom_call.1} parent=1 // pred_check
      _
    $region15: #{tpu_custom_call.1} parent=1 // pred_check_branch
      %37 = sbr.rel (0) target = $region17
    $region16: #{tpu_custom_call.1} parent=1 // pred_region
      %39 = dma.done [#allocation4], 384
    $region17: #{tpu_custom_call.1} parent=1 // pred_fallthru
      _
    %40 = sfence
    %s41 = sld [smem:[#allocation3]]
    %v42 = vld [vmem:[#allocation7] sm:$0xff]
    %v43 = vstv %s41
    %v44 = vmul.f32 %v42, %v43
    %v45 = vmax.f32 %v44, 0.0
    %v46 = vmin.f32 %v45, 1.0
    %s47 = scalar_lea.vmem [#allocation7], 8
    %v48 = vld [vmem:[%s47] sm:$0xff]
    %v49 = vmul.f32 %v48, %v43
    %v50 = vmax.f32 %v49, 0.0
    %v51 = vmin.f32 %v50, 1.0
    %s52 = scalar_lea.vmem [#allocation7], 16
    %v53 = vld [vmem:[%s52] sm:$0xff]
    %v54 = vmul.f32 %v53, %v43
    %v55 = vmax.f32 %v54, 0.0
    %v56 = vmin.f32 %v55, 1.0
    %v57 = vmul.f32 %v46, 0.2989
    %v58 = vmul.f32 %v51, 0.587
    %v59 = vadd.f32 %v57, %v58
    %v60 = vmul.f32 %v56, 0.114
    %v61 = vadd.f32 %v59, %v60
    %v62 = vadd.f32 %v61, 0.0
    %p63 = scmp.eq.s32.totalorder 0, 0
    // Predicated region
    $region18: #{tpu_custom_call.1} parent=1 // pred_check
      %p64 = pneg %p63
    $region19: #{tpu_custom_call.1} parent=1 // pred_check_branch
      %66 = sbr.rel (%p64) target = $region21
    $region20: #{tpu_custom_call.1} parent=1 // pred_region
      %67 = vst [vmem:[#allocation2] sm:$0xff] 0.0
    $region21: #{tpu_custom_call.1} parent=1 // pred_fallthru
      _
    %v68 = vld [vmem:[#allocation2] sm:$0xff]
    %v69 = vadd.f32 %v68, %v62
    %70 = vst [vmem:[#allocation2] sm:$0xff] %v69
    // Predicated region
    $region22: #{tpu_custom_call.1} parent=1 // pred_check
      %p71 = pneg %p63
    $region23: #{tpu_custom_call.1} parent=1 // pred_check_branch
      %73 = sbr.rel (%p71) target = $region25
    $region24: #{tpu_custom_call.1} parent=1 // pred_region
      %v74 = vld [vmem:[#allocation2] sm:$0xff]
      %75 = vadd.xlane.f32.xlu0 %v74
      %v76 = vpop.xlane.xlu0 %75
      %v77 = vrot.slane %v76, 4
      %v78 = vadd.f32 %v76, %v77
      %v79 = vrot.slane %v78, 2
      %v80 = vadd.f32 %v78, %v79
      %v81 = vrot.slane %v80, 1
      %v82 = vadd.f32 %v80, %v81
      %s83 = vtos %v82
      %s84 = scalar_lea.smem [#allocation8], 0
      %85 = sst [smem:[%s84]] %s83
    $region25: #{tpu_custom_call.1} parent=1 // pred_fallthru
      _
    // Predicated region
    $region26: #{tpu_custom_call.1} parent=1 // pred_check
      _
    $region27: #{tpu_custom_call.1} parent=1 // pred_check_branch
      %87 = sbr.rel (0) target = $region29
    $region28: #{tpu_custom_call.1} parent=1 // pred_region
      %89 = vsyncadd [#allocation6], 0
      %s91 = sshll.u32 %s2, 4
      %s92 = int_to_ptr.hbm [resolvable:$true] %s91
      %94 = dma.smem_to_hbm [#allocation8], 16, %s92, [#allocation6]
    $region29: #{tpu_custom_call.1} parent=1 // pred_fallthru
      _
    // Predicated region
    $region30: #{tpu_custom_call.1} parent=1 // pred_check
      _
    $region31: #{tpu_custom_call.1} parent=1 // pred_check_branch
      %96 = sbr.rel (0) target = $region33
    $region32: #{tpu_custom_call.1} parent=1 // pred_region
      %98 = dma.done [#allocation6], 16
    $region33: #{tpu_custom_call.1} parent=1 // pred_fallthru
      _
    %99 = sfence
    %100 = vsyncpa [#allocation4], 1
    %101 = vsyncpa [#allocation5], 1
    %102 = vsyncpa [#allocation6], 1

</llo_original>
